<compile_context>
chip_gen: v7x
topology: tpu7x:2x2x1
jax: 0.10.0
libtpu: 0.0.40
codegen_flags: <defaults>
</compile_context>

<pallas_src>
import math

import jax
import jax.numpy as jnp
from jax.experimental import pallas as pl
from jax.experimental.pallas import tpu as pltpu


LANE = 128


def _round_up(v, m):
    return ((v + m - 1) // m) * m


# ---------------------------------------------------------------------------
# Tiled SAGEConv + ReLU layer kernel (large-N path):
#   acc = sum_k A[i-block, k-block] @ X[k-block]        (f32 accumulator scratch)
#   h   = relu((acc * inv_deg) @ WlT + b + X[i-block] @ WrT)
# Grid = (row blocks [parallel], reduction blocks [arbitrary, innermost]).
# NOTE: the resident accumulator relies on the reduction axis being the INNERMOST
# grid axis and marked "arbitrary"; do not reorder axes without updating the
# k==0 / k==last gating.
# ---------------------------------------------------------------------------
def sage_layer_kernel(a_ref, x_ref, invdeg_ref, wl_ref, b_ref, wr_ref,
                      h_ref, acc_ref):
    i = pl.program_id(0)
    k = pl.program_id(1)
    tile_m, tile_k = a_ref.shape

    @pl.when(k == 0)
    def _():
        acc_ref[...] = jnp.zeros_like(acc_ref)

    # Partial neighbor sum for this column block: 0/1 bf16 A times bf16 X, f32 acc.
    xk = x_ref[pl.ds(pl.multiple_of(k * tile_k, tile_k), tile_k), :]
    acc_ref[...] += jnp.dot(a_ref[...], xk, preferred_element_type=jnp.float32)

    @pl.when(k == pl.num_programs(1) - 1)
    def _():
        # Mean normalization applied once, in f32, after full accumulation.
        nbr = (acc_ref[...] * invdeg_ref[...]).astype(jnp.bfloat16)
        xs = x_ref[pl.ds(pl.multiple_of(i * tile_m, tile_m), tile_m), :]
        h = (jnp.dot(nbr, wl_ref[...], preferred_element_type=jnp.float32)   # lin_l
             + b_ref[...]                                                    # bias (lin_l only)
             + jnp.dot(xs, wr_ref[...], preferred_element_type=jnp.float32)) # lin_r (no bias)
        h_ref[...] = jnp.maximum(h, 0.0).astype(h_ref.dtype)                 # ReLU


def _sage_layer_tiled(a01, x_pad, inv_deg, wl_t, b_row, wr_t, *, tile_m, tile_k):
    """One SAGEConv + ReLU over padded operands. Returns bf16 [N_pad, H_pad]."""
    n_pad = a01.shape[0]
    c_pad = x_pad.shape[1]
    h_pad = wl_t.shape[1]
    assert n_pad % tile_m == 0 and n_pad % tile_k == 0, (n_pad, tile_m, tile_k)
    grid = (n_pad // tile_m, n_pad // tile_k)

    return pl.pallas_call(
        sage_layer_kernel,
        out_shape=jax.ShapeDtypeStruct((n_pad, h_pad), jnp.bfloat16),
        grid_spec=pltpu.PrefetchScalarGridSpec(
            num_scalar_prefetch=0,
            grid=grid,
            in_specs=[
                # Row/column tile of the 0/1 adjacency (dominant HBM stream).
                pl.BlockSpec((tile_m, tile_k), lambda i, k: (i, k)),
                # Node features: full array, constant index_map -> VMEM resident.
                pl.BlockSpec((n_pad, c_pad), lambda i, k: (0, 0)),
                # Per-row 1/deg (f32), varies with the row block only.
                pl.BlockSpec((tile_m, 1), lambda i, k: (i, 0)),
                # Weights / bias: constant index_map -> resident across the grid.
                pl.BlockSpec((c_pad, h_pad), lambda i, k: (0, 0)),   # W_l^T [in, out]
                pl.BlockSpec((1, h_pad), lambda i, k: (0, 0)),       # b_l   [1, out]
                pl.BlockSpec((c_pad, h_pad), lambda i, k: (0, 0)),   # W_r^T [in, out]
            ],
            out_specs=pl.BlockSpec((tile_m, h_pad), lambda i, k: (i, 0)),
            scratch_shapes=[pltpu.VMEM((tile_m, c_pad), jnp.float32)],
        ),
        compiler_params=pltpu.CompilerParams(
            # Row blocks independent -> shard across TCs; reduction axis carries the
            # accumulator -> "arbitrary".
            dimension_semantics=("parallel", "arbitrary"),
            # Headroom below v7x's 64 MiB physical VMEM.
            vmem_limit_bytes=48 * 1024 * 1024,
        ),
    )(a01, x_pad, inv_deg, wl_t, b_row, wr_t)


# ---------------------------------------------------------------------------
# Small-graph fast path: both SAGE layers fused in a single gridless call,
# everything resident in VMEM (no intermediate HBM round-trip, one launch).
# ---------------------------------------------------------------------------
def fused_two_layer_kernel(a_ref, x_ref, invdeg_ref,
                           w1l_ref, b1_ref, w1r_ref,
                           w2l_ref, b2_ref, w2r_ref, h2_ref):
    a = a_ref[...]
    x = x_ref[...]
    inv_deg = invdeg_ref[...]

    # ---- SAGEConv 1 + ReLU ----
    nbr1 = (jnp.dot(a, x, preferred_element_type=jnp.float32) * inv_deg
            ).astype(jnp.bfloat16)
    h1 = jnp.maximum(
        jnp.dot(nbr1, w1l_ref[...], preferred_element_type=jnp.float32)
        + b1_ref[...]
        + jnp.dot(x, w1r_ref[...], preferred_element_type=jnp.float32),
        0.0).astype(jnp.bfloat16)
    # dropout(p=0.2) is identity at inference.

    # ---- SAGEConv 2 + ReLU ----
    nbr2 = (jnp.dot(a, h1, preferred_element_type=jnp.float32) * inv_deg
            ).astype(jnp.bfloat16)
    h2 = jnp.maximum(
        jnp.dot(nbr2, w2l_ref[...], preferred_element_type=jnp.float32)
        + b2_ref[...]
        + jnp.dot(h1, w2r_ref[...], preferred_element_type=jnp.float32),
        0.0)
    h2_ref[...] = h2.astype(h2_ref.dtype)


def _fused_two_layers(a01, x_pad, inv_deg, w1l_t, b1, w1r_t, w2l_t, b2, w2r_t):
    n_pad = a01.shape[0]
    h_pad = w2l_t.shape[1]
    vmem_spec = pl.BlockSpec(memory_space=pltpu.MemorySpace.VMEM)
    return pl.pallas_call(
        fused_two_layer_kernel,
        out_shape=jax.ShapeDtypeStruct((n_pad, h_pad), jnp.bfloat16),
        in_specs=[vmem_spec] * 9,
        out_specs=vmem_spec,
        compiler_params=pltpu.CompilerParams(vmem_limit_bytes=48 * 1024 * 1024),
    )(a01, x_pad, inv_deg, w1l_t, b1, w1r_t, w2l_t, b2, w2r_t)


# ---------------------------------------------------------------------------
# Wrapper: build padded dense operands, dispatch fused vs tiled path, and run
# the tiny pool/linear/log_softmax epilogue in plain XLA.
# ---------------------------------------------------------------------------
def enzyme_graphsage_forward(x, edge_index, batch, params, num_graphs,
                             *, tile_m=512, tile_k=512, fused_threshold=2048):
    (w1l, b1l, w1r, w2l, b2l, w2r, wlin, blin) = params
    n, in_ch = x.shape
    hid = w1l.shape[0]

    c_pad = _round_up(in_ch, LANE)
    h_pad = _round_up(hid, LANE)

    use_fused = _round_up(n, LANE) <= fused_threshold
    if use_fused:
        n_pad = _round_up(n, LANE)
    else:
        # Pad N to a common multiple of both tiles so no reduction block is dropped.
        n_pad = _round_up(n, math.lcm(tile_m, tile_k))

    src, dst = edge_index[0], edge_index[1]

    # Exact 0/1 adjacency (bf16: small edge counts are exact); in-degree via an
    # O(E) scatter; mean normalization happens in f32 inside the kernels.
    a01 = (jnp.zeros((n_pad, n_pad), jnp.float32).at[dst, src].add(1.0)
           .astype(jnp.bfloat16))
    deg = jnp.zeros((n_pad,), jnp.float32).at[dst].add(1.0)
    inv_deg = (1.0 / jnp.maximum(deg, 1.0)).reshape(n_pad, 1)

    # Zero-padded bf16 node features.
    x_pad = (jnp.zeros((n_pad, c_pad), jnp.float32)
             .at[:n, :in_ch].set(x.astype(jnp.float32))
             .astype(jnp.bfloat16))

    # Pre-transposed ([in, out]) zero-padded bf16 weights; f32 biases as [1, H_pad].
    def pad_t(w, rows, cols):
        wt = w.T.astype(jnp.bfloat16)
        return jnp.zeros((rows, cols), jnp.bfloat16).at[:wt.shape[0], :wt.shape[1]].set(wt)

    w1l_t = pad_t(w1l, c_pad, h_pad)
    w1r_t = pad_t(w1r, c_pad, h_pad)
    w2l_t = pad_t(w2l, h_pad, h_pad)
    w2r_t = pad_t(w2r, h_pad, h_pad)
    b1 = jnp.zeros((1, h_pad), jnp.float32).at[0, :hid].set(b1l.astype(jnp.float32))
    b2 = jnp.zeros((1, h_pad), jnp.float32).at[0, :hid].set(b2l.astype(jnp.float32))

    if use_fused:
        h2 = _fused_two_layers(a01, x_pad, inv_deg, w1l_t, b1, w1r_t, w2l_t, b2, w2r_t)
    else:
        h1 = _sage_layer_tiled(a01, x_pad, inv_deg, w1l_t, b1, w1r_t,
                               tile_m=tile_m, tile_k=tile_k)
        h2 = _sage_layer_tiled(a01, h1, inv_deg, w2l_t, b2, w2r_t,
                               tile_m=tile_m, tile_k=tile_k)

    # ---- global_mean_pool + Linear + log_softmax (tiny, lane-sparse -> plain XLA) ----
    pmat = jnp.zeros((num_graphs, n_pad), jnp.float32).at[batch, jnp.arange(n)].set(1.0)
    counts = jnp.zeros((num_graphs, 1), jnp.float32).at[batch, 0].add(1.0)
    pmat = pmat / jnp.maximum(counts, 1.0)
    pooled = pmat @ h2.astype(jnp.float32)               # [G, H_pad]; padded cols are 0
    logits = pooled[:, :hid] @ wlin.T.astype(jnp.float32) + blin.astype(jnp.float32)
    return jax.nn.log_softmax(logits, axis=1)


# ---------------------------------------------------------------------------
# Pure-JAX f32 reference (same math, no padding / bf16) for correctness check.
# ---------------------------------------------------------------------------
def reference_forward(x, edge_index, batch, params, num_graphs):
    (w1l, b1l, w1r, w2l, b2l, w2r, wlin, blin) = params
    n = x.shape[0]
    adj = jnp.zeros((n, n), jnp.float32).at[edge_index[1], edge_index[0]].add(1.0)
    a = adj / jnp.maximum(jnp.sum(adj, axis=1, keepdims=True), 1.0)
    h1 = jnp.maximum(a @ x @ w1l.T + b1l + x @ w1r.T, 0.0)
    h2 = jnp.maximum(a @ h1 @ w2l.T + b2l + h1 @ w2r.T, 0.0)
    pmat = jnp.zeros((num_graphs, n), jnp.float32).at[batch, jnp.arange(n)].set(1.0)
    pmat = pmat / jnp.maximum(jnp.sum(pmat, axis=1, keepdims=True), 1.0)
    logits = pmat @ h2 @ wlin.T + blin
    return jax.nn.log_softmax(logits, axis=1)


def init_params(key, in_channels, hidden_channels, out_channels):
    """Deterministic synthetic parameter init (PyTorch-style [out, in] weights)."""
    ks = jax.random.split(key, 8)

    def u(k, shape, fan_in):
        bound = 1.0 / jnp.sqrt(fan_in)
        return jax.random.uniform(k, shape, jnp.float32, -bound, bound)

    w1l = u(ks[0], (hidden_channels, in_channels), in_channels)
    b1l = u(ks[1], (hidden_channels,), in_channels)
    w1r = u(ks[2], (hidden_channels, in_channels), in_channels)
    w2l = u(ks[3], (hidden_channels, hidden_channels), hidden_channels)
    b2l = u(ks[4], (hidden_channels,), hidden_channels)
    w2r = u(ks[5], (hidden_channels, hidden_channels), hidden_channels)
    wlin = u(ks[6], (out_channels, hidden_channels), hidden_channels)
    blin = u(ks[7], (out_channels,), hidden_channels)
    return (w1l, b1l, w1r, w2l, b2l, w2r, wlin, blin)


if __name__ == "__main__":
    key = jax.random.PRNGKey(0)
    kx, kp = jax.random.split(key, 2)

    N = 16            # total nodes over all graphs in the batch
    IN_CH = 8         # input node feature dim
    HID = 32          # hidden_channels
    OUT_CH = 2        # out_channels (binary classification)
    NUM_GRAPHS = 2

    # Node features.
    x = jax.random.normal(kx, (N, IN_CH), jnp.float32)

    # Deterministic small edge set (directed edges src -> dst), within each graph.
    edge_index = jnp.array([
        # graph 0 (nodes 0..7)          graph 1 (nodes 8..15)
        [0, 1, 2, 3, 4, 5, 6, 7, 1, 3,   8, 9, 10, 11, 12, 13, 14, 15, 9, 12],
        [1, 2, 3, 4, 5, 6, 7, 0, 5, 6,   9, 10, 11, 12, 13, 14, 15, 8, 13, 15],
    ], dtype=jnp.int32)
    batch = jnp.array([0] * 8 + [1] * 8, dtype=jnp.int32)

    params = init_params(kp, IN_CH, HID, OUT_CH)

    # ---- Test 1: shipped toy size -> fused single-call path ----
    out = enzyme_graphsage_forward(x, edge_index, batch, params, NUM_GRAPHS)
    out = jax.block_until_ready(out)
    assert out.shape == (NUM_GRAPHS, OUT_CH)
    assert jnp.allclose(jnp.sum(jnp.exp(out), axis=1), 1.0, atol=1e-5)
    ref = reference_forward(x, edge_index, batch, params, NUM_GRAPHS)
    assert jnp.allclose(out, ref, atol=1e-1), (out, ref)

    # ---- Test 2: force the tiled/grid path (accumulator + resident-X logic) ----
    kx2, ke2 = jax.random.split(jax.random.PRNGKey(1), 2)
    N2, E2 = 300, 450
    x2 = jax.random.normal(kx2, (N2, IN_CH), jnp.float32)
    half = N2 // 2
    src2 = jax.random.randint(ke2, (E2,), 0, half, dtype=jnp.int32)
    dst2 = jax.random.randint(jax.random.fold_in(ke2, 1), (E2,), 0, half, dtype=jnp.int32)
    edge_index2 = jnp.concatenate(
        [jnp.stack([src2, dst2]), jnp.stack([src2 + half, dst2 + half])], axis=1)
    batch2 = jnp.concatenate([jnp.zeros(half, jnp.int32), jnp.ones(half, jnp.int32)])
    out2 = enzyme_graphsage_forward(x2, edge_index2, batch2, params, NUM_GRAPHS,
                                    tile_m=256, tile_k=256, fused_threshold=0)
    out2 = jax.block_until_ready(out2)
    ref2 = reference_forward(x2, edge_index2, batch2, params, NUM_GRAPHS)
    assert out2.shape == (NUM_GRAPHS, OUT_CH)
    assert jnp.allclose(jnp.sum(jnp.exp(out2), axis=1), 1.0, atol=1e-5)
    assert jnp.allclose(out2, ref2, atol=1e-1), (out2, ref2)

    print("KERNEL_OK")
</pallas_src>

<mosaic_0001>
module attributes {stable_mosaic.version = 11 : i64} {
  func.func @fused_two_layer_kernel(%arg0: memref<128x128xbf16, #tpu.memory_space<vmem>>, %arg1: memref<128x128xbf16, #tpu.memory_space<vmem>>, %arg2: memref<128x1xf32, #tpu.memory_space<vmem>>, %arg3: memref<128x128xbf16, #tpu.memory_space<vmem>>, %arg4: memref<1x128xf32, #tpu.memory_space<vmem>>, %arg5: memref<128x128xbf16, #tpu.memory_space<vmem>>, %arg6: memref<128x128xbf16, #tpu.memory_space<vmem>>, %arg7: memref<1x128xf32, #tpu.memory_space<vmem>>, %arg8: memref<128x128xbf16, #tpu.memory_space<vmem>>, %arg9: memref<128x128xbf16, #tpu.memory_space<vmem>>) attributes {dimension_semantics = [], scalar_prefetch = 0 : i64, scratch_operands = 0 : i64, tpu.core_type = #tpu.core_type<tc>} {
    %c0 = arith.constant 0 : index
    %c0_0 = arith.constant 0 : index
    %0 = vector.load %arg0[%c0, %c0_0] : memref<128x128xbf16, #tpu.memory_space<vmem>>, vector<128x128xbf16>
    %c0_1 = arith.constant 0 : index
    %c0_2 = arith.constant 0 : index
    %1 = vector.load %arg1[%c0_1, %c0_2] : memref<128x128xbf16, #tpu.memory_space<vmem>>, vector<128x128xbf16>
    %c0_3 = arith.constant 0 : index
    %c0_4 = arith.constant 0 : index
    %2 = vector.load %arg2[%c0_3, %c0_4] : memref<128x1xf32, #tpu.memory_space<vmem>>, vector<128x1xf32>
    %cst = arith.constant dense<0.000000e+00> : vector<128x128xf32>
    %3 = tpu.matmul %0, %1, %cst {dimension_numbers = #tpu.dot_dimension_numbers<[1], [0], [0], [1], [0, 0, 1, 1], [], []>} : vector<128x128xbf16>, vector<128x128xbf16>, vector<128x128xf32> -> vector<128x128xf32>
    %4 = vector.broadcast %2 : vector<128x1xf32> to vector<128x128xf32>
    %5 = arith.mulf %3, %4 : vector<128x128xf32>
    %6 = arith.truncf %5 : vector<128x128xf32> to vector<128x128xbf16>
    %c0_5 = arith.constant 0 : index
    %c0_6 = arith.constant 0 : index
    %7 = vector.load %arg3[%c0_5, %c0_6] : memref<128x128xbf16, #tpu.memory_space<vmem>>, vector<128x128xbf16>
    %cst_7 = arith.constant dense<0.000000e+00> : vector<128x128xf32>
    %8 = tpu.matmul %6, %7, %cst_7 {dimension_numbers = #tpu.dot_dimension_numbers<[1], [0], [0], [1], [0, 0, 1, 1], [], []>} : vector<128x128xbf16>, vector<128x128xbf16>, vector<128x128xf32> -> vector<128x128xf32>
    %c0_8 = arith.constant 0 : index
    %c0_9 = arith.constant 0 : index
    %9 = vector.load %arg4[%c0_8, %c0_9] : memref<1x128xf32, #tpu.memory_space<vmem>>, vector<1x128xf32>
    %10 = vector.broadcast %9 : vector<1x128xf32> to vector<128x128xf32>
    %11 = arith.addf %8, %10 : vector<128x128xf32>
    %c0_10 = arith.constant 0 : index
    %c0_11 = arith.constant 0 : index
    %12 = vector.load %arg5[%c0_10, %c0_11] : memref<128x128xbf16, #tpu.memory_space<vmem>>, vector<128x128xbf16>
    %cst_12 = arith.constant dense<0.000000e+00> : vector<128x128xf32>
    %13 = tpu.matmul %1, %12, %cst_12 {dimension_numbers = #tpu.dot_dimension_numbers<[1], [0], [0], [1], [0, 0, 1, 1], [], []>} : vector<128x128xbf16>, vector<128x128xbf16>, vector<128x128xf32> -> vector<128x128xf32>
    %14 = arith.addf %11, %13 : vector<128x128xf32>
    %cst_13 = arith.constant 0.000000e+00 : f32
    %15 = vector.broadcast %cst_13 : f32 to vector<128x128xf32>
    %16 = arith.maximumf %14, %15 : vector<128x128xf32>
    %17 = arith.truncf %16 : vector<128x128xf32> to vector<128x128xbf16>
    %cst_14 = arith.constant dense<0.000000e+00> : vector<128x128xf32>
    %18 = tpu.matmul %0, %17, %cst_14 {dimension_numbers = #tpu.dot_dimension_numbers<[1], [0], [0], [1], [0, 0, 1, 1], [], []>} : vector<128x128xbf16>, vector<128x128xbf16>, vector<128x128xf32> -> vector<128x128xf32>
    %19 = vector.broadcast %2 : vector<128x1xf32> to vector<128x128xf32>
    %20 = arith.mulf %18, %19 : vector<128x128xf32>
    %21 = arith.truncf %20 : vector<128x128xf32> to vector<128x128xbf16>
    %c0_15 = arith.constant 0 : index
    %c0_16 = arith.constant 0 : index
    %22 = vector.load %arg6[%c0_15, %c0_16] : memref<128x128xbf16, #tpu.memory_space<vmem>>, vector<128x128xbf16>
    %cst_17 = arith.constant dense<0.000000e+00> : vector<128x128xf32>
    %23 = tpu.matmul %21, %22, %cst_17 {dimension_numbers = #tpu.dot_dimension_numbers<[1], [0], [0], [1], [0, 0, 1, 1], [], []>} : vector<128x128xbf16>, vector<128x128xbf16>, vector<128x128xf32> -> vector<128x128xf32>
    %c0_18 = arith.constant 0 : index
    %c0_19 = arith.constant 0 : index
    %24 = vector.load %arg7[%c0_18, %c0_19] : memref<1x128xf32, #tpu.memory_space<vmem>>, vector<1x128xf32>
    %25 = vector.broadcast %24 : vector<1x128xf32> to vector<128x128xf32>
    %26 = arith.addf %23, %25 : vector<128x128xf32>
    %c0_20 = arith.constant 0 : index
    %c0_21 = arith.constant 0 : index
    %27 = vector.load %arg8[%c0_20, %c0_21] : memref<128x128xbf16, #tpu.memory_space<vmem>>, vector<128x128xbf16>
    %cst_22 = arith.constant dense<0.000000e+00> : vector<128x128xf32>
    %28 = tpu.matmul %17, %27, %cst_22 {dimension_numbers = #tpu.dot_dimension_numbers<[1], [0], [0], [1], [0, 0, 1, 1], [], []>} : vector<128x128xbf16>, vector<128x128xbf16>, vector<128x128xf32> -> vector<128x128xf32>
    %29 = arith.addf %26, %28 : vector<128x128xf32>
    %cst_23 = arith.constant 0.000000e+00 : f32
    %30 = vector.broadcast %cst_23 : f32 to vector<128x128xf32>
    %31 = arith.maximumf %29, %30 : vector<128x128xf32>
    %32 = arith.truncf %31 : vector<128x128xf32> to vector<128x128xbf16>
    %c0_24 = arith.constant 0 : index
    %c0_25 = arith.constant 0 : index
    %33 = vector.load %arg9[%c0_24, %c0_25] : memref<128x128xbf16, #tpu.memory_space<vmem>>, vector<128x128xbf16>
    tpu.vector_store %arg9[%c0_24, %c0_25], %32 {strides = array<i32>} : memref<128x128xbf16, #tpu.memory_space<vmem>>, vector<128x128xbf16>,
    return
  }
}

</mosaic_0001>

<llo_original>
// kernel: tpu_custom_call.1
$region0: #{tpu_custom_call.1}
  #allocation0 [shape = 'u32[]', space=smem, size = 0x4, offset = 0x4, fixed_abs, tag = 'smem constant byte address 0x4 - core index']
  #allocation1 [shape = 'u32[144,128]{1,0:T(1,128)}', space=vmem, size = 0x12000, scoped, tag = 'internal scratch']
  %s0 = inlined_call_operand.vmem [shape: bf16[128,128], index: 0, kind: input, shape index: {}]
  %s1 = inlined_call_operand.vmem [shape: bf16[128,128], index: 1, kind: input, shape index: {}]
  %s2 = inlined_call_operand.vmem [shape: f32[128,1], index: 2, kind: input, shape index: {}]
  %s3 = inlined_call_operand.hbm [shape: bf16[128,128], index: 3, kind: input, shape index: {}]
  %s4 = inlined_call_operand.vmem [shape: f32[1,128], index: 4, kind: input, shape index: {}]
  %s5 = inlined_call_operand.hbm [shape: bf16[128,128], index: 5, kind: input, shape index: {}]
  %s6 = inlined_call_operand.hbm [shape: bf16[128,128], index: 6, kind: input, shape index: {}]
  %s7 = inlined_call_operand.vmem [shape: f32[1,128], index: 7, kind: input, shape index: {}]
  %s8 = inlined_call_operand.hbm [shape: bf16[128,128], index: 8, kind: input, shape index: {}]
  %s9 = inlined_call_operand.hbm [shape: bf16[128,128], index: 9, kind: output, shape index: {}]
  %s10 = sld [smem:[#allocation0]]
  $region62: #{tpu_custom_call.1} parent=0
    _
  %s12 = ssub.s32 1, %s10
  %s13 = scalar_select 0, %s12, %s10
  $region1: #{tpu_custom_call.1} parent=0
    #allocation2 [shape = 'u8[32768]{0}', space=vmem, size = 0x8000, scoped, tag = 'input window, operand 3, single buffered']
    #allocation3 [shape = 's32[1]{0}', space=sflag, size = 0x4, scoped, tag = 'scoped memory for tpu_custom_call.1']
    #allocation4 [shape = 's32[1]{0}', space=sflag, size = 0x4, scoped, tag = 'scoped memory for tpu_custom_call.1']
    #allocation5 [shape = 'u8[32768]{0}', space=vmem, size = 0x8000, scoped, tag = 'input window, operand 5, single buffered']
    #allocation6 [shape = 's32[1]{0}', space=sflag, size = 0x4, scoped, tag = 'scoped memory for tpu_custom_call.1']
    #allocation7 [shape = 'u8[32768]{0}', space=vmem, size = 0x8000, scoped, tag = 'input window, operand 6, single buffered']
    #allocation8 [shape = 'u8[32768]{0}', space=vmem, size = 0x8000, scoped, tag = 'input window, operand 8, single buffered']
    #allocation9 [shape = 's32[1]{0}', space=sflag, size = 0x4, scoped, tag = 'scoped memory for tpu_custom_call.1']
    #allocation10 [shape = 'u8[32768]{0}', space=vmem, size = 0x8000, scoped, tag = 'output window, operand 0, single buffered']
    %14 = vsyncpa [#allocation3], 0
    %15 = vsyncpa [#allocation6], 0
    %16 = vsyncpa [#allocation9], 0
    %17 = vsyncpa [#allocation4], 0
    // Predicated region
    $region2: #{tpu_custom_call.1} parent=1 // pred_check
      _
    $region3: #{tpu_custom_call.1} parent=1 // pred_check_branch
      %19 = sbr.rel (0) target = $region5
    $region4: #{tpu_custom_call.1} parent=1 // pred_region
      _
    $region5: #{tpu_custom_call.1} parent=1 // pred_fallthru
      _
    // Predicated region
    $region6: #{tpu_custom_call.1} parent=1 // pred_check
      _
    $region7: #{tpu_custom_call.1} parent=1 // pred_check_branch
      %21 = sbr.rel (0) target = $region9
    $region8: #{tpu_custom_call.1} parent=1 // pred_region
      _
    $region9: #{tpu_custom_call.1} parent=1 // pred_fallthru
      _
    // Predicated region
    $region10: #{tpu_custom_call.1} parent=1 // pred_check
      _
    $region11: #{tpu_custom_call.1} parent=1 // pred_check_branch
      %23 = sbr.rel (0) target = $region13
    $region12: #{tpu_custom_call.1} parent=1 // pred_region
      _
    $region13: #{tpu_custom_call.1} parent=1 // pred_fallthru
      _
    // Predicated region
    $region14: #{tpu_custom_call.1} parent=1 // pred_check
      _
    $region15: #{tpu_custom_call.1} parent=1 // pred_check_branch
      %25 = sbr.rel (0) target = $region17
    $region16: #{tpu_custom_call.1} parent=1 // pred_region
      %s27 = ssub.s32 1024, 1024
      %28 = vsyncadd [#allocation3], %s27
      %s29 = sshll.u32 [#allocation2], 4
      %s30 = int_to_ptr.vmem [resolvable:$true] %s29
      %35 = dma.hbm_to_vmem [thread:$0]  %s3, 1024, %s30, [#allocation3], 64, 64, 4
    $region17: #{tpu_custom_call.1} parent=1 // pred_fallthru
      _
    // Predicated region
    $region18: #{tpu_custom_call.1} parent=1 // pred_check
      _
    $region19: #{tpu_custom_call.1} parent=1 // pred_check_branch
      %37 = sbr.rel (0) target = $region21
    $region20: #{tpu_custom_call.1} parent=1 // pred_region
      _
    $region21: #{tpu_custom_call.1} parent=1 // pred_fallthru
      _
    // Predicated region
    $region22: #{tpu_custom_call.1} parent=1 // pred_check
      _
    $region23: #{tpu_custom_call.1} parent=1 // pred_check_branch
      %39 = sbr.rel (0) target = $region25
    $region24: #{tpu_custom_call.1} parent=1 // pred_region
      %s41 = ssub.s32 1024, 1024
      %42 = vsyncadd [#allocation6], %s41
      %s43 = sshll.u32 [#allocation5], 4
      %s44 = int_to_ptr.vmem [resolvable:$true] %s43
      %49 = dma.hbm_to_vmem [thread:$0]  %s5, 1024, %s44, [#allocation6], 64, 64, 4
    $region25: #{tpu_custom_call.1} parent=1 // pred_fallthru
      _
    // Predicated region
    $region26: #{tpu_custom_call.1} parent=1 // pred_check
      _
    $region27: #{tpu_custom_call.1} parent=1 // pred_check_branch
      %51 = sbr.rel (0) target = $region29
    $region28: #{tpu_custom_call.1} parent=1 // pred_region
      %s53 = ssub.s32 1024, 1024
      %54 = vsyncadd [#allocation6], %s53
      %s55 = sshll.u32 [#allocation7], 4
      %s56 = int_to_ptr.vmem [resolvable:$true] %s55
      %61 = dma.hbm_to_vmem [thread:$0]  %s6, 1024, %s56, [#allocation6], 64, 64, 4
    $region29: #{tpu_custom_call.1} parent=1 // pred_fallthru
      _
    // Predicated region
    $region30: #{tpu_custom_call.1} parent=1 // pred_check
      _
    $region31: #{tpu_custom_call.1} parent=1 // pred_check_branch
      %63 = sbr.rel (0) target = $region33
    $region32: #{tpu_custom_call.1} parent=1 // pred_region
      _
    $region33: #{tpu_custom_call.1} parent=1 // pred_fallthru
      _
    // Predicated region
    $region34: #{tpu_custom_call.1} parent=1 // pred_check
      _
    $region35: #{tpu_custom_call.1} parent=1 // pred_check_branch
      %65 = sbr.rel (0) target = $region37
    $region36: #{tpu_custom_call.1} parent=1 // pred_region
      %s67 = ssub.s32 1024, 1024
      %68 = vsyncadd [#allocation9], %s67
      %s69 = sshll.u32 [#allocation8], 4
      %s70 = int_to_ptr.vmem [resolvable:$true] %s69
      %75 = dma.hbm_to_vmem [thread:$0]  %s8, 1024, %s70, [#allocation9], 64, 64, 4
    $region37: #{tpu_custom_call.1} parent=1 // pred_fallthru
      _
    // Predicated region
    $region38: #{tpu_custom_call.1} parent=1 // pred_check
      _
    $region39: #{tpu_custom_call.1} parent=1 // pred_check_branch
      %77 = sbr.rel (0) target = $region41
    $region40: #{tpu_custom_call.1} parent=1 // pred_region
      %78 = dma.done [#allocation3], 1024
    $region41: #{tpu_custom_call.1} parent=1 // pred_fallthru
      _
    // Predicated region
    $region42: #{tpu_custom_call.1} parent=1 // pred_check
      _
    $region43: #{tpu_custom_call.1} parent=1 // pred_check_branch
      %80 = sbr.rel (0) target = $region45
    $region44: #{tpu_custom_call.1} parent=1 // pred_region
      %81 = dma.done [#allocation6], 1024
    $region45: #{tpu_custom_call.1} parent=1 // pred_fallthru
      _
    // Predicated region
    $region46: #{tpu_custom_call.1} parent=1 // pred_check
      _
    $region47: #{tpu_custom_call.1} parent=1 // pred_check_branch
      %83 = sbr.rel (0) target = $region49
    $region48: #{tpu_custom_call.1} parent=1 // pred_region
      %84 = dma.done [#allocation6], 1024
    $region49: #{tpu_custom_call.1} parent=1 // pred_fallthru
      _
    // Predicated region
    $region50: #{tpu_custom_call.1} parent=1 // pred_check
      _
    $region51: #{tpu_custom_call.1} parent=1 // pred_check_branch
      %86 = sbr.rel (0) target = $region53
    $region52: #{tpu_custom_call.1} parent=1 // pred_region
      %87 = dma.done [#allocation9], 1024
    $region53: #{tpu_custom_call.1} parent=1 // pred_fallthru
      _
    %v89 = vld [vmem:[%s0] sm:$0xf]
    %v90 = vld [vmem:[%s0 + $0x4] sm:$0xf]
    %v91 = vld [vmem:[%s0 + $0x8] sm:$0xf]
    %v92 = vld [vmem:[%s0 + $0xc] sm:$0xf]
    %v93 = vld [vmem:[%s0 + $0x10] sm:$0xf]
    %v94 = vld [vmem:[%s0 + $0x14] sm:$0xf]
    %v95 = vld [vmem:[%s0 + $0x18] sm:$0xf]
    %v96 = vld [vmem:[%s0 + $0x1c] sm:$0xf]
    %v97 = vld [vmem:[%s0 + $0x20] sm:$0xf]
    %v98 = vld [vmem:[%s0 + $0x24] sm:$0xf]
    %v99 = vld [vmem:[%s0 + $0x28] sm:$0xf]
    %v100 = vld [vmem:[%s0 + $0x2c] sm:$0xf]
    %v101 = vld [vmem:[%s0 + $0x30] sm:$0xf]
    %v102 = vld [vmem:[%s0 + $0x34] sm:$0xf]
    %v103 = vld [vmem:[%s0 + $0x38] sm:$0xf]
    %v104 = vld [vmem:[%s0 + $0x3c] sm:$0xf]
    %v105 = vld [vmem:[%s1] sm:$0xf]
    %v106 = vld [vmem:[%s1 + $0x4] sm:$0xf]
    %v107 = vld [vmem:[%s1 + $0x8] sm:$0xf]
    %v108 = vld [vmem:[%s1 + $0xc] sm:$0xf]
    %v109 = vld [vmem:[%s1 + $0x10] sm:$0xf]
    %v110 = vld [vmem:[%s1 + $0x14] sm:$0xf]
    %v111 = vld [vmem:[%s1 + $0x18] sm:$0xf]
    %v112 = vld [vmem:[%s1 + $0x1c] sm:$0xf]
    %v113 = vld [vmem:[%s1 + $0x20] sm:$0xf]
    %v114 = vld [vmem:[%s1 + $0x24] sm:$0xf]
    %v115 = vld [vmem:[%s1 + $0x28] sm:$0xf]
    %v116 = vld [vmem:[%s1 + $0x2c] sm:$0xf]
    %v117 = vld [vmem:[%s1 + $0x30] sm:$0xf]
    %v118 = vld [vmem:[%s1 + $0x34] sm:$0xf]
    %v119 = vld [vmem:[%s1 + $0x38] sm:$0xf]
    %v120 = vld [vmem:[%s1 + $0x3c] sm:$0xf]
    %v121 = vld [vmem:[%s2] sm:$0xff]
    %v122 = vld [vmem:[%s2 + $0x8] sm:$0xff]
    %v123 = vld [vmem:[%s2 + $0x10] sm:$0xff]
    %v124 = vld [vmem:[%s2 + $0x18] sm:$0xff]
    %v125 = vld [vmem:[%s2 + $0x20] sm:$0xff]
    %v126 = vld [vmem:[%s2 + $0x28] sm:$0xff]
    %v127 = vld [vmem:[%s2 + $0x30] sm:$0xff]
    %v128 = vld [vmem:[%s2 + $0x38] sm:$0xff]
    %v129 = vld [vmem:[%s2 + $0x40] sm:$0xff]
    %v130 = vld [vmem:[%s2 + $0x48] sm:$0xff]
    %v131 = vld [vmem:[%s2 + $0x50] sm:$0xff]
    %v132 = vld [vmem:[%s2 + $0x58] sm:$0xff]
    %v133 = vld [vmem:[%s2 + $0x60] sm:$0xff]
    %v134 = vld [vmem:[%s2 + $0x68] sm:$0xff]
    %v135 = vld [vmem:[%s2 + $0x70] sm:$0xff]
    %v136 = vld [vmem:[%s2 + $0x78] sm:$0xff]
    %v153 = vunpack.c.l.b16 %v89
    %v154 = vunpack.c.l.b16 %v90
    %v155 = vunpack.c.l.b16 %v91
    %v156 = vunpack.c.l.b16 %v92
    %v157 = vunpack.c.l.b16 %v93
    %v158 = vunpack.c.l.b16 %v94
    %v159 = vunpack.c.l.b16 %v95
    %v160 = vunpack.c.l.b16 %v96
    %v161 = vunpack.c.l.b16 %v97
    %v162 = vunpack.c.l.b16 %v98
    %v163 = vunpack.c.l.b16 %v99
    %v164 = vunpack.c.l.b16 %v100
    %v165 = vunpack.c.l.b16 %v101
    %v166 = vunpack.c.l.b16 %v102
    %v167 = vunpack.c.l.b16 %v103
    %v168 = vunpack.c.l.b16 %v104
    %v169 = vpack.c.b16 %v154, %v153
    %v170 = vpack.c.b16 %v156, %v155
    %v171 = vpack.c.b16 %v158, %v157
    %v172 = vpack.c.b16 %v160, %v159
    %v173 = vpack.c.b16 %v162, %v161
    %v174 = vpack.c.b16 %v164, %v163
    %v175 = vpack.c.b16 %v166, %v165
    %v176 = vpack.c.b16 %v168, %v167
    %v201 = vunpack.c.l.b16 %v105
    %v202 = vunpack.c.l.b16 %v106
    %v203 = vunpack.c.l.b16 %v107
    %v204 = vunpack.c.l.b16 %v108
    %v205 = vunpack.c.l.b16 %v109
    %v206 = vunpack.c.l.b16 %v110
    %v207 = vunpack.c.l.b16 %v111
    %v208 = vunpack.c.l.b16 %v112
    %v209 = vunpack.c.l.b16 %v113
    %v210 = vunpack.c.l.b16 %v114
    %v211 = vunpack.c.l.b16 %v115
    %v212 = vunpack.c.l.b16 %v116
    %v213 = vunpack.c.l.b16 %v117
    %v214 = vunpack.c.l.b16 %v118
    %v215 = vunpack.c.l.b16 %v119
    %v216 = vunpack.c.l.b16 %v120
    %v217 = vpack.c.b16 %v202, %v201
    %v218 = vpack.c.b16 %v204, %v203
    %v219 = vpack.c.b16 %v206, %v205
    %v220 = vpack.c.b16 %v208, %v207
    %v221 = vpack.c.b16 %v210, %v209
    %v222 = vpack.c.b16 %v212, %v211
    %v223 = vpack.c.b16 %v214, %v213
    %v224 = vpack.c.b16 %v216, %v215
    %233 = vmatprep.subr.bf16.mxu0 0
    %234 = vmatpush1.bf16.msra.mxu0 %v217
    %235 = vmatprep.subr.bf16.mxu0 0
    %236 = vmatpush1.bf16.msra.mxu0 %v218
    %237 = vmatprep.subr.bf16.mxu0 0
    %238 = vmatpush1.bf16.msra.mxu0 %v219
    %239 = vmatprep.subr.bf16.mxu0 0
    %240 = vmatpush1.bf16.msra.mxu0 %v220
    %241 = vmatprep.subr.bf16.mxu0 0
    %242 = vmatpush1.bf16.msra.mxu0 %v221
    %243 = vmatprep.subr.bf16.mxu0 0
    %244 = vmatpush1.bf16.msra.mxu0 %v222
    %245 = vmatprep.subr.bf16.mxu0 0
    %246 = vmatpush1.bf16.msra.mxu0 %v223
    %247 = vmatprep.subr.bf16.mxu0 0
    %248 = vmatpush1.bf16.msra.mxu0 %v224
    %249 = vmatprep.subr.bf16.mxu0 0
    %250 = vmatpush1.bf16.msra.mxu0 0
    %251 = vmatprep.subr.bf16.mxu0 0
    %252 = vmatpush1.bf16.msra.mxu0 0
    %253 = vmatprep.subr.bf16.mxu0 0
    %254 = vmatpush1.bf16.msra.mxu0 0
    %255 = vmatprep.subr.bf16.mxu0 0
    %256 = vmatpush1.bf16.msra.mxu0 0
    %257 = vmatprep.subr.bf16.mxu0 0
    %258 = vmatpush1.bf16.msra.mxu0 0
    %259 = vmatprep.subr.bf16.mxu0 0
    %260 = vmatpush1.bf16.msra.mxu0 0
    %261 = vmatprep.subr.bf16.mxu0 0
    %262 = vmatpush1.bf16.msra.mxu0 0
    %263 = vmatprep.subr.bf16.mxu0 0
    %264 = vmatpush1.bf16.msra.mxu0 0
    %265 = vmatprep.mubr.bf16.mxu0 0
    %266 = vmatmul.mubr.bf16.gmra.mrb[0].mxu0 %v169
    %v267 = vpop.f32.mrb[0].mxu0
    %v268 = vadd.f32 0.0, %v267
    %v269 = vpop.f32.mrb[0].mxu0
    %v270 = vpop.f32.mrb[0].mxu0
    %v271 = vadd.f32 0.0, %v270
    %v272 = vpop.f32.mrb[0].mxu0
    %273 = vmatprep.mubr.bf16.mxu0 0
    %274 = vmatmul.mubr.bf16.gmra.mrb[0].mxu0 %v170
    %v275 = vpop.f32.mrb[0].mxu0
    %v276 = vadd.f32 0.0, %v275
    %v277 = vpop.f32.mrb[0].mxu0
    %v278 = vpop.f32.mrb[0].mxu0
    %v279 = vadd.f32 0.0, %v278
    %v280 = vpop.f32.mrb[0].mxu0
    %281 = vmatprep.mubr.bf16.mxu0 0
    %282 = vmatmul.mubr.bf16.gmra.mrb[0].mxu0 %v171
    %v283 = vpop.f32.mrb[0].mxu0
    %v284 = vadd.f32 0.0, %v283
    %v285 = vpop.f32.mrb[0].mxu0
    %v286 = vpop.f32.mrb[0].mxu0
    %v287 = vadd.f32 0.0, %v286
    %v288 = vpop.f32.mrb[0].mxu0
    %289 = vmatprep.mubr.bf16.mxu0 0
    %290 = vmatmul.mubr.bf16.gmra.mrb[0].mxu0 %v172
    %v291 = vpop.f32.mrb[0].mxu0
    %v292 = vadd.f32 0.0, %v291
    %v293 = vpop.f32.mrb[0].mxu0
    %v294 = vpop.f32.mrb[0].mxu0
    %v295 = vadd.f32 0.0, %v294
    %v296 = vpop.f32.mrb[0].mxu0
    %297 = vmatprep.mubr.bf16.mxu0 0
    %298 = vmatmul.mubr.bf16.gmra.mrb[0].mxu0 %v173
    %v299 = vpop.f32.mrb[0].mxu0
    %v300 = vadd.f32 0.0, %v299
    %v301 = vpop.f32.mrb[0].mxu0
    %v302 = vpop.f32.mrb[0].mxu0
    %v303 = vadd.f32 0.0, %v302
    %v304 = vpop.f32.mrb[0].mxu0
    %305 = vmatprep.mubr.bf16.mxu0 0
    %306 = vmatmul.mubr.bf16.gmra.mrb[0].mxu0 %v174
    %v307 = vpop.f32.mrb[0].mxu0
    %v308 = vadd.f32 0.0, %v307
    %v309 = vpop.f32.mrb[0].mxu0
    %v310 = vpop.f32.mrb[0].mxu0
    %v311 = vadd.f32 0.0, %v310
    %v312 = vpop.f32.mrb[0].mxu0
    %313 = vmatprep.mubr.bf16.mxu0 0
    %314 = vmatmul.mubr.bf16.gmra.mrb[0].mxu0 %v175
    %v315 = vpop.f32.mrb[0].mxu0
    %v316 = vadd.f32 0.0, %v315
    %v317 = vpop.f32.mrb[0].mxu0
    %v318 = vpop.f32.mrb[0].mxu0
    %v319 = vadd.f32 0.0, %v318
    %v320 = vpop.f32.mrb[0].mxu0
    %321 = vmatprep.mubr.bf16.mxu0 0
    %322 = vmatmul.mubr.bf16.gmra.mrb[0].mxu0 %v176
    %v323 = vpop.f32.mrb[0].mxu0
    %v324 = vadd.f32 0.0, %v323
    %v325 = vpop.f32.mrb[0].mxu0
    %v326 = vpop.f32.mrb[0].mxu0
    %v327 = vadd.f32 0.0, %v326
    %v328 = vpop.f32.mrb[0].mxu0
    %329 = vdwg.mxu0
    %331 = vset.pattern.permute.xlu0 0
    %332 = vperm.xlu0 %331, %v121
    %v333 = vpop.permute.xlu0 %332
    %336 = vset.pattern.permute.xlu0 0
    %337 = vperm.xlu0 %336, %v122
    %v338 = vpop.permute.xlu0 %337
    %341 = vset.pattern.permute.xlu0 0
    %342 = vperm.xlu0 %341, %v123
    %v343 = vpop.permute.xlu0 %342
    %346 = vset.pattern.permute.xlu0 0
    %347 = vperm.xlu0 %346, %v124
    %v348 = vpop.permute.xlu0 %347
    %351 = vset.pattern.permute.xlu0 0
    %352 = vperm.xlu0 %351, %v125
    %v353 = vpop.permute.xlu0 %352
    %356 = vset.pattern.permute.xlu0 0
    %357 = vperm.xlu0 %356, %v126
    %v358 = vpop.permute.xlu0 %357
    %361 = vset.pattern.permute.xlu0 0
    %362 = vperm.xlu0 %361, %v127
    %v363 = vpop.permute.xlu0 %362
    %366 = vset.pattern.permute.xlu0 0
    %367 = vperm.xlu0 %366, %v128
    %v368 = vpop.permute.xlu0 %367
    %371 = vset.pattern.permute.xlu0 0
    %372 = vperm.xlu0 %371, %v129
    %v373 = vpop.permute.xlu0 %372
    %376 = vset.pattern.permute.xlu0 0
    %377 = vperm.xlu0 %376, %v130
    %v378 = vpop.permute.xlu0 %377
    %381 = vset.pattern.permute.xlu0 0
    %382 = vperm.xlu0 %381, %v131
    %v383 = vpop.permute.xlu0 %382
    %386 = vset.pattern.permute.xlu0 0
    %387 = vperm.xlu0 %386, %v132
    %v388 = vpop.permute.xlu0 %387
    %391 = vset.pattern.permute.xlu0 0
    %392 = vperm.xlu0 %391, %v133
    %v393 = vpop.permute.xlu0 %392
    %396 = vset.pattern.permute.xlu0 0
    %397 = vperm.xlu0 %396, %v134
    %v398 = vpop.permute.xlu0 %397
    %401 = vset.pattern.permute.xlu0 0
    %402 = vperm.xlu0 %401, %v135
    %v403 = vpop.permute.xlu0 %402
    %406 = vset.pattern.permute.xlu0 0
    %407 = vperm.xlu0 %406, %v136
    %v408 = vpop.permute.xlu0 %407
    %v410 = vmul.f32 %v268, %v333
    %v411 = vmul.f32 %v271, %v338
    %v412 = vmul.f32 %v276, %v343
    %v413 = vmul.f32 %v279, %v348
    %v414 = vmul.f32 %v284, %v353
    %v415 = vmul.f32 %v287, %v358
    %v416 = vmul.f32 %v292, %v363
    %v417 = vmul.f32 %v295, %v368
    %v418 = vmul.f32 %v300, %v373
    %v419 = vmul.f32 %v303, %v378
    %v420 = vmul.f32 %v308, %v383
    %v421 = vmul.f32 %v311, %v388
    %v422 = vmul.f32 %v316, %v393
    %v423 = vmul.f32 %v319, %v398
    %v424 = vmul.f32 %v324, %v403
    %v425 = vmul.f32 %v327, %v408
    %v426 = vpack.c.bf16 %v411, %v410
    %v427 = vpack.c.bf16 %v413, %v412
    %v428 = vpack.c.bf16 %v415, %v414
    %v429 = vpack.c.bf16 %v417, %v416
    %v430 = vpack.c.bf16 %v419, %v418
    %v431 = vpack.c.bf16 %v421, %v420
    %v432 = vpack.c.bf16 %v423, %v422
    %v433 = vpack.c.bf16 %v425, %v424
    %v434 = vld [vmem:[#allocation2] sm:$0xf]
    %v435 = vld [vmem:[#allocation2 + $0x4] sm:$0xf]
    %v436 = vld [vmem:[#allocation2 + $0x8] sm:$0xf]
    %v437 = vld [vmem:[#allocation2 + $0xc] sm:$0xf]
    %v438 = vld [vmem:[#allocation2 + $0x10] sm:$0xf]
    %v439 = vld [vmem:[#allocation2 + $0x14] sm:$0xf]
    %v440 = vld [vmem:[#allocation2 + $0x18] sm:$0xf]
    %v441 = vld [vmem:[#allocation2 + $0x1c] sm:$0xf]
    %v442 = vld [vmem:[#allocation2 + $0x20] sm:$0xf]
    %v443 = vld [vmem:[#allocation2 + $0x24] sm:$0xf]
    %v444 = vld [vmem:[#allocation2 + $0x28] sm:$0xf]
    %v445 = vld [vmem:[#allocation2 + $0x2c] sm:$0xf]
    %v446 = vld [vmem:[#allocation2 + $0x30] sm:$0xf]
    %v447 = vld [vmem:[#allocation2 + $0x34] sm:$0xf]
    %v448 = vld [vmem:[#allocation2 + $0x38] sm:$0xf]
    %v449 = vld [vmem:[#allocation2 + $0x3c] sm:$0xf]
    %v450 = vld [vmem:[%s4] sm:$0x1]
    %v452 = vlaneseq
    %v453 = vshrl.u32 %v452, 7
    %v454 = vsub.s32 0, %v453
    %v455 = vrot.slane %v450, %v454
    %v473 = vunpack.c.l.b16 %v434
    %v474 = vunpack.c.l.b16 %v435
    %v475 = vunpack.c.l.b16 %v436
    %v476 = vunpack.c.l.b16 %v437
    %v477 = vunpack.c.l.b16 %v438
    %v478 = vunpack.c.l.b16 %v439
    %v479 = vunpack.c.l.b16 %v440
    %v480 = vunpack.c.l.b16 %v441
    %v481 = vunpack.c.l.b16 %v442
    %v482 = vunpack.c.l.b16 %v443
    %v483 = vunpack.c.l.b16 %v444
    %v484 = vunpack.c.l.b16 %v445
    %v485 = vunpack.c.l.b16 %v446
    %v486 = vunpack.c.l.b16 %v447
    %v487 = vunpack.c.l.b16 %v448
    %v488 = vunpack.c.l.b16 %v449
    %v489 = vpack.c.b16 %v474, %v473
    %v490 = vpack.c.b16 %v476, %v475
    %v491 = vpack.c.b16 %v478, %v477
    %v492 = vpack.c.b16 %v480, %v479
    %v493 = vpack.c.b16 %v482, %v481
    %v494 = vpack.c.b16 %v484, %v483
    %v495 = vpack.c.b16 %v486, %v485
    %v496 = vpack.c.b16 %v488, %v487
    %505 = vmatprep.subr.bf16.mxu0 0
    %506 = vmatpush1.bf16.msra.mxu0 %v489
    %507 = vmatprep.subr.bf16.mxu0 0
    %508 = vmatpush1.bf16.msra.mxu0 %v490
    %509 = vmatprep.subr.bf16.mxu0 0
    %510 = vmatpush1.bf16.msra.mxu0 %v491
    %511 = vmatprep.subr.bf16.mxu0 0
    %512 = vmatpush1.bf16.msra.mxu0 %v492
    %513 = vmatprep.subr.bf16.mxu0 0
    %514 = vmatpush1.bf16.msra.mxu0 %v493
    %515 = vmatprep.subr.bf16.mxu0 0
    %516 = vmatpush1.bf16.msra.mxu0 %v494
    %517 = vmatprep.subr.bf16.mxu0 0
    %518 = vmatpush1.bf16.msra.mxu0 %v495
    %519 = vmatprep.subr.bf16.mxu0 0
    %520 = vmatpush1.bf16.msra.mxu0 %v496
    %521 = vmatprep.subr.bf16.mxu0 0
    %522 = vmatpush1.bf16.msra.mxu0 0
    %523 = vmatprep.subr.bf16.mxu0 0
    %524 = vmatpush1.bf16.msra.mxu0 0
    %525 = vmatprep.subr.bf16.mxu0 0
    %526 = vmatpush1.bf16.msra.mxu0 0
    %527 = vmatprep.subr.bf16.mxu0 0
    %528 = vmatpush1.bf16.msra.mxu0 0
    %529 = vmatprep.subr.bf16.mxu0 0
    %530 = vmatpush1.bf16.msra.mxu0 0
    %531 = vmatprep.subr.bf16.mxu0 0
    %532 = vmatpush1.bf16.msra.mxu0 0
    %533 = vmatprep.subr.bf16.mxu0 0
    %534 = vmatpush1.bf16.msra.mxu0 0
    %535 = vmatprep.subr.bf16.mxu0 0
    %536 = vmatpush1.bf16.msra.mxu0 0
    %537 = vmatprep.mubr.bf16.mxu0 0
    %538 = vmatmul.mubr.bf16.gmra.mrb[0].mxu0 %v426
    %v539 = vpop.f32.mrb[0].mxu0
    %v540 = vadd.f32 %v455, %v539
    %v541 = vpop.f32.mrb[0].mxu0
    %v542 = vpop.f32.mrb[0].mxu0
    %v543 = vadd.f32 %v455, %v542
    %v544 = vpop.f32.mrb[0].mxu0
    %545 = vmatprep.mubr.bf16.mxu0 0
    %546 = vmatmul.mubr.bf16.gmra.mrb[0].mxu0 %v427
    %v547 = vpop.f32.mrb[0].mxu0
    %v548 = vadd.f32 %v455, %v547
    %v549 = vpop.f32.mrb[0].mxu0
    %v550 = vpop.f32.mrb[0].mxu0
    %v551 = vadd.f32 %v455, %v550
    %v552 = vpop.f32.mrb[0].mxu0
    %553 = vmatprep.mubr.bf16.mxu0 0
    %554 = vmatmul.mubr.bf16.gmra.mrb[0].mxu0 %v428
    %v555 = vpop.f32.mrb[0].mxu0
    %v556 = vadd.f32 %v455, %v555
    %v557 = vpop.f32.mrb[0].mxu0
    %v558 = vpop.f32.mrb[0].mxu0
    %v559 = vadd.f32 %v455, %v558
    %v560 = vpop.f32.mrb[0].mxu0
    %561 = vmatprep.mubr.bf16.mxu0 0
    %562 = vmatmul.mubr.bf16.gmra.mrb[0].mxu0 %v429
    %v563 = vpop.f32.mrb[0].mxu0
    %v564 = vadd.f32 %v455, %v563
    %v565 = vpop.f32.mrb[0].mxu0
    %v566 = vpop.f32.mrb[0].mxu0
    %v567 = vadd.f32 %v455, %v566
    %v568 = vpop.f32.mrb[0].mxu0
    %569 = vmatprep.mubr.bf16.mxu0 0
    %570 = vmatmul.mubr.bf16.gmra.mrb[0].mxu0 %v430
    %v571 = vpop.f32.mrb[0].mxu0
    %v572 = vadd.f32 %v455, %v571
    %v573 = vpop.f32.mrb[0].mxu0
    %v574 = vpop.f32.mrb[0].mxu0
    %v575 = vadd.f32 %v455, %v574
    %v576 = vpop.f32.mrb[0].mxu0
    %577 = vmatprep.mubr.bf16.mxu0 0
    %578 = vmatmul.mubr.bf16.gmra.mrb[0].mxu0 %v431
    %v579 = vpop.f32.mrb[0].mxu0
    %v580 = vadd.f32 %v455, %v579
    %v581 = vpop.f32.mrb[0].mxu0
    %v582 = vpop.f32.mrb[0].mxu0
    %v583 = vadd.f32 %v455, %v582
    %v584 = vpop.f32.mrb[0].mxu0
    %585 = vmatprep.mubr.bf16.mxu0 0
    %586 = vmatmul.mubr.bf16.gmra.mrb[0].mxu0 %v432
    %v587 = vpop.f32.mrb[0].mxu0
    %v588 = vadd.f32 %v455, %v587
    %v589 = vpop.f32.mrb[0].mxu0
    %v590 = vpop.f32.mrb[0].mxu0
    %v591 = vadd.f32 %v455, %v590
    %v592 = vpop.f32.mrb[0].mxu0
    %593 = vmatprep.mubr.bf16.mxu0 0
    %594 = vmatmul.mubr.bf16.gmra.mrb[0].mxu0 %v433
    %v595 = vpop.f32.mrb[0].mxu0
    %v596 = vadd.f32 %v455, %v595
    %v597 = vpop.f32.mrb[0].mxu0
    %v598 = vpop.f32.mrb[0].mxu0
    %v599 = vadd.f32 %v455, %v598
    %v600 = vpop.f32.mrb[0].mxu0
    %601 = vdwg.mxu0
    %v602 = vld [vmem:[#allocation5] sm:$0xf]
    %v603 = vld [vmem:[#allocation5 + $0x4] sm:$0xf]
    %v604 = vld [vmem:[#allocation5 + $0x8] sm:$0xf]
    %v605 = vld [vmem:[#allocation5 + $0xc] sm:$0xf]
    %v606 = vld [vmem:[#allocation5 + $0x10] sm:$0xf]
    %v607 = vld [vmem:[#allocation5 + $0x14] sm:$0xf]
    %v608 = vld [vmem:[#allocation5 + $0x18] sm:$0xf]
    %v609 = vld [vmem:[#allocation5 + $0x1c] sm:$0xf]
    %v610 = vld [vmem:[#allocation5 + $0x20] sm:$0xf]
    %v611 = vld [vmem:[#allocation5 + $0x24] sm:$0xf]
    %v612 = vld [vmem:[#allocation5 + $0x28] sm:$0xf]
    %v613 = vld [vmem:[#allocation5 + $0x2c] sm:$0xf]
    %v614 = vld [vmem:[#allocation5 + $0x30] sm:$0xf]
    %v615 = vld [vmem:[#allocation5 + $0x34] sm:$0xf]
    %v616 = vld [vmem:[#allocation5 + $0x38] sm:$0xf]
    %v617 = vld [vmem:[#allocation5 + $0x3c] sm:$0xf]
    %v634 = vunpack.c.l.b16 %v602
    %v635 = vunpack.c.l.b16 %v603
    %v636 = vunpack.c.l.b16 %v604
    %v637 = vunpack.c.l.b16 %v605
    %v638 = vunpack.c.l.b16 %v606
    %v639 = vunpack.c.l.b16 %v607
    %v640 = vunpack.c.l.b16 %v608
    %v641 = vunpack.c.l.b16 %v609
    %v642 = vunpack.c.l.b16 %v610
    %v643 = vunpack.c.l.b16 %v611
    %v644 = vunpack.c.l.b16 %v612
    %v645 = vunpack.c.l.b16 %v613
    %v646 = vunpack.c.l.b16 %v614
    %v647 = vunpack.c.l.b16 %v615
    %v648 = vunpack.c.l.b16 %v616
    %v649 = vunpack.c.l.b16 %v617
    %v650 = vpack.c.b16 %v635, %v634
    %v651 = vpack.c.b16 %v637, %v636
    %v652 = vpack.c.b16 %v639, %v638
    %v653 = vpack.c.b16 %v641, %v640
    %v654 = vpack.c.b16 %v643, %v642
    %v655 = vpack.c.b16 %v645, %v644
    %v656 = vpack.c.b16 %v647, %v646
    %v657 = vpack.c.b16 %v649, %v648
    %666 = vmatprep.subr.bf16.mxu0 0
    %667 = vmatpush1.bf16.msra.mxu0 %v650
    %668 = vmatprep.subr.bf16.mxu0 0
    %669 = vmatpush1.bf16.msra.mxu0 %v651
    %670 = vmatprep.subr.bf16.mxu0 0
    %671 = vmatpush1.bf16.msra.mxu0 %v652
    %672 = vmatprep.subr.bf16.mxu0 0
    %673 = vmatpush1.bf16.msra.mxu0 %v653
    %674 = vmatprep.subr.bf16.mxu0 0
    %675 = vmatpush1.bf16.msra.mxu0 %v654
    %676 = vmatprep.subr.bf16.mxu0 0
    %677 = vmatpush1.bf16.msra.mxu0 %v655
    %678 = vmatprep.subr.bf16.mxu0 0
    %679 = vmatpush1.bf16.msra.mxu0 %v656
    %680 = vmatprep.subr.bf16.mxu0 0
    %681 = vmatpush1.bf16.msra.mxu0 %v657
    %682 = vmatprep.subr.bf16.mxu0 0
    %683 = vmatpush1.bf16.msra.mxu0 0
    %684 = vmatprep.subr.bf16.mxu0 0
    %685 = vmatpush1.bf16.msra.mxu0 0
    %686 = vmatprep.subr.bf16.mxu0 0
    %687 = vmatpush1.bf16.msra.mxu0 0
    %688 = vmatprep.subr.bf16.mxu0 0
    %689 = vmatpush1.bf16.msra.mxu0 0
    %690 = vmatprep.subr.bf16.mxu0 0
    %691 = vmatpush1.bf16.msra.mxu0 0
    %692 = vmatprep.subr.bf16.mxu0 0
    %693 = vmatpush1.bf16.msra.mxu0 0
    %694 = vmatprep.subr.bf16.mxu0 0
    %695 = vmatpush1.bf16.msra.mxu0 0
    %696 = vmatprep.subr.bf16.mxu0 0
    %697 = vmatpush1.bf16.msra.mxu0 0
    %698 = vmatprep.mubr.bf16.mxu0 0
    %699 = vmatmul.mubr.bf16.gmra.mrb[0].mxu0 %v217
    %v700 = vpop.f32.mrb[0].mxu0
    %v701 = vadd.f32 0.0, %v700
    %v702 = vpop.f32.mrb[0].mxu0
    %v703 = vpop.f32.mrb[0].mxu0
    %v704 = vadd.f32 0.0, %v703
    %v705 = vpop.f32.mrb[0].mxu0
    %706 = vmatprep.mubr.bf16.mxu0 0
    %707 = vmatmul.mubr.bf16.gmra.mrb[0].mxu0 %v218
    %v708 = vpop.f32.mrb[0].mxu0
    %v709 = vadd.f32 0.0, %v708
    %v710 = vpop.f32.mrb[0].mxu0
    %v711 = vpop.f32.mrb[0].mxu0
    %v712 = vadd.f32 0.0, %v711
    %v713 = vpop.f32.mrb[0].mxu0
    %714 = vmatprep.mubr.bf16.mxu0 0
    %715 = vmatmul.mubr.bf16.gmra.mrb[0].mxu0 %v219
    %v716 = vpop.f32.mrb[0].mxu0
    %v717 = vadd.f32 0.0, %v716
    %v718 = vpop.f32.mrb[0].mxu0
    %v719 = vpop.f32.mrb[0].mxu0
    %v720 = vadd.f32 0.0, %v719
    %v721 = vpop.f32.mrb[0].mxu0
    %722 = vmatprep.mubr.bf16.mxu0 0
    %723 = vmatmul.mubr.bf16.gmra.mrb[0].mxu0 %v220
    %v724 = vpop.f32.mrb[0].mxu0
    %v725 = vadd.f32 0.0, %v724
    %v726 = vpop.f32.mrb[0].mxu0
    %v727 = vpop.f32.mrb[0].mxu0
    %v728 = vadd.f32 0.0, %v727
    %v729 = vpop.f32.mrb[0].mxu0
    %730 = vmatprep.mubr.bf16.mxu0 0
    %731 = vmatmul.mubr.bf16.gmra.mrb[0].mxu0 %v221
    %v732 = vpop.f32.mrb[0].mxu0
    %v733 = vadd.f32 0.0, %v732
    %v734 = vpop.f32.mrb[0].mxu0
    %v735 = vpop.f32.mrb[0].mxu0
    %v736 = vadd.f32 0.0, %v735
    %v737 = vpop.f32.mrb[0].mxu0
    %738 = vmatprep.mubr.bf16.mxu0 0
    %739 = vmatmul.mubr.bf16.gmra.mrb[0].mxu0 %v222
    %v740 = vpop.f32.mrb[0].mxu0
    %v741 = vadd.f32 0.0, %v740
    %v742 = vpop.f32.mrb[0].mxu0
    %v743 = vpop.f32.mrb[0].mxu0
    %v744 = vadd.f32 0.0, %v743
    %v745 = vpop.f32.mrb[0].mxu0
    %746 = vmatprep.mubr.bf16.mxu0 0
    %747 = vmatmul.mubr.bf16.gmra.mrb[0].mxu0 %v223
    %v748 = vpop.f32.mrb[0].mxu0
    %v749 = vadd.f32 0.0, %v748
    %v750 = vpop.f32.mrb[0].mxu0
    %v751 = vpop.f32.mrb[0].mxu0
    %v752 = vadd.f32 0.0, %v751
    %v753 = vpop.f32.mrb[0].mxu0
    %754 = vmatprep.mubr.bf16.mxu0 0
    %755 = vmatmul.mubr.bf16.gmra.mrb[0].mxu0 %v224
    %v756 = vpop.f32.mrb[0].mxu0
    %v757 = vadd.f32 0.0, %v756
    %v758 = vpop.f32.mrb[0].mxu0
    %v759 = vpop.f32.mrb[0].mxu0
    %v760 = vadd.f32 0.0, %v759
    %v761 = vpop.f32.mrb[0].mxu0
    %762 = vdwg.mxu0
    %v763 = vadd.f32 %v540, %v701
    %v764 = vadd.f32 %v543, %v704
    %v765 = vadd.f32 %v548, %v709
    %v766 = vadd.f32 %v551, %v712
    %v767 = vadd.f32 %v556, %v717
    %v768 = vadd.f32 %v559, %v720
    %v769 = vadd.f32 %v564, %v725
    %v770 = vadd.f32 %v567, %v728
    %v771 = vadd.f32 %v572, %v733
    %v772 = vadd.f32 %v575, %v736
    %v773 = vadd.f32 %v580, %v741
    %v774 = vadd.f32 %v583, %v744
    %v775 = vadd.f32 %v588, %v749
    %v776 = vadd.f32 %v591, %v752
    %v777 = vadd.f32 %v596, %v757
    %v778 = vadd.f32 %v599, %v760
    %v779 = vmax.f32 %v763, 0.0
    %v780 = vmax.f32 %v764, 0.0
    %v781 = vmax.f32 %v765, 0.0
    %v782 = vmax.f32 %v766, 0.0
    %v783 = vmax.f32 %v767, 0.0
    %v784 = vmax.f32 %v768, 0.0
    %v785 = vmax.f32 %v769, 0.0
    %v786 = vmax.f32 %v770, 0.0
    %v787 = vmax.f32 %v771, 0.0
    %v788 = vmax.f32 %v772, 0.0
    %v789 = vmax.f32 %v773, 0.0
    %v790 = vmax.f32 %v774, 0.0
    %v791 = vmax.f32 %v775, 0.0
    %v792 = vmax.f32 %v776, 0.0
    %v793 = vmax.f32 %v777, 0.0
    %v794 = vmax.f32 %v778, 0.0
    %v795 = vpack.c.bf16 %v780, %v779
    %v796 = vpack.c.bf16 %v782, %v781
    %v797 = vpack.c.bf16 %v784, %v783
    %v798 = vpack.c.bf16 %v786, %v785
    %v799 = vpack.c.bf16 %v788, %v787
    %v800 = vpack.c.bf16 %v790, %v789
    %v801 = vpack.c.bf16 %v792, %v791
    %v802 = vpack.c.bf16 %v794, %v793
    %803 = vmatprep.subr.bf16.mxu0 0
    %804 = vmatpush1.bf16.msra.mxu0 %v795
    %805 = vmatprep.subr.bf16.mxu0 0
    %806 = vmatpush1.bf16.msra.mxu0 %v796
    %807 = vmatprep.subr.bf16.mxu0 0
    %808 = vmatpush1.bf16.msra.mxu0 %v797
    %809 = vmatprep.subr.bf16.mxu0 0
    %810 = vmatpush1.bf16.msra.mxu0 %v798
    %811 = vmatprep.subr.bf16.mxu0 0
    %812 = vmatpush1.bf16.msra.mxu0 %v799
    %813 = vmatprep.subr.bf16.mxu0 0
    %814 = vmatpush1.bf16.msra.mxu0 %v800
    %815 = vmatprep.subr.bf16.mxu0 0
    %816 = vmatpush1.bf16.msra.mxu0 %v801
    %817 = vmatprep.subr.bf16.mxu0 0
    %818 = vmatpush1.bf16.msra.mxu0 %v802
    %819 = vmatprep.subr.bf16.mxu0 0
    %820 = vmatpush1.bf16.msra.mxu0 0
    %821 = vmatprep.subr.bf16.mxu0 0
    %822 = vmatpush1.bf16.msra.mxu0 0
    %823 = vmatprep.subr.bf16.mxu0 0
    %824 = vmatpush1.bf16.msra.mxu0 0
    %825 = vmatprep.subr.bf16.mxu0 0
    %826 = vmatpush1.bf16.msra.mxu0 0
    %827 = vmatprep.subr.bf16.mxu0 0
    %828 = vmatpush1.bf16.msra.mxu0 0
    %829 = vmatprep.subr.bf16.mxu0 0
    %830 = vmatpush1.bf16.msra.mxu0 0
    %831 = vmatprep.subr.bf16.mxu0 0
    %832 = vmatpush1.bf16.msra.mxu0 0
    %833 = vmatprep.subr.bf16.mxu0 0
    %834 = vmatpush1.bf16.msra.mxu0 0
    %835 = vmatprep.mubr.bf16.mxu0 0
    %836 = vmatmul.mubr.bf16.gmra.mrb[0].mxu0 %v169
    %v837 = vpop.f32.mrb[0].mxu0
    %v838 = vadd.f32 0.0, %v837
    %v839 = vpop.f32.mrb[0].mxu0
    %v840 = vpop.f32.mrb[0].mxu0
    %v841 = vadd.f32 0.0, %v840
    %v842 = vpop.f32.mrb[0].mxu0
    %843 = vmatprep.mubr.bf16.mxu0 0
    %844 = vmatmul.mubr.bf16.gmra.mrb[0].mxu0 %v170
    %v845 = vpop.f32.mrb[0].mxu0
    %v846 = vadd.f32 0.0, %v845
    %v847 = vpop.f32.mrb[0].mxu0
    %v848 = vpop.f32.mrb[0].mxu0
    %v849 = vadd.f32 0.0, %v848
    %v850 = vpop.f32.mrb[0].mxu0
    %851 = vmatprep.mubr.bf16.mxu0 0
    %852 = vmatmul.mubr.bf16.gmra.mrb[0].mxu0 %v171
    %v853 = vpop.f32.mrb[0].mxu0
    %v854 = vadd.f32 0.0, %v853
    %v855 = vpop.f32.mrb[0].mxu0
    %v856 = vpop.f32.mrb[0].mxu0
    %v857 = vadd.f32 0.0, %v856
    %v858 = vpop.f32.mrb[0].mxu0
    %859 = vmatprep.mubr.bf16.mxu0 0
    %860 = vmatmul.mubr.bf16.gmra.mrb[0].mxu0 %v172
    %v861 = vpop.f32.mrb[0].mxu0
    %v862 = vadd.f32 0.0, %v861
    %v863 = vpop.f32.mrb[0].mxu0
    %v864 = vpop.f32.mrb[0].mxu0
    %v865 = vadd.f32 0.0, %v864
    %v866 = vpop.f32.mrb[0].mxu0
    %867 = vmatprep.mubr.bf16.mxu0 0
    %868 = vmatmul.mubr.bf16.gmra.mrb[0].mxu0 %v173
    %v869 = vpop.f32.mrb[0].mxu0
    %v870 = vadd.f32 0.0, %v869
    %v871 = vpop.f32.mrb[0].mxu0
    %v872 = vpop.f32.mrb[0].mxu0
    %v873 = vadd.f32 0.0, %v872
    %v874 = vpop.f32.mrb[0].mxu0
    %875 = vmatprep.mubr.bf16.mxu0 0
    %876 = vmatmul.mubr.bf16.gmra.mrb[0].mxu0 %v174
    %v877 = vpop.f32.mrb[0].mxu0
    %v878 = vadd.f32 0.0, %v877
    %v879 = vpop.f32.mrb[0].mxu0
    %v880 = vpop.f32.mrb[0].mxu0
    %v881 = vadd.f32 0.0, %v880
    %v882 = vpop.f32.mrb[0].mxu0
    %883 = vmatprep.mubr.bf16.mxu0 0
    %884 = vmatmul.mubr.bf16.gmra.mrb[0].mxu0 %v175
    %v885 = vpop.f32.mrb[0].mxu0
    %v886 = vadd.f32 0.0, %v885
    %v887 = vpop.f32.mrb[0].mxu0
    %v888 = vpop.f32.mrb[0].mxu0
    %v889 = vadd.f32 0.0, %v888
    %v890 = vpop.f32.mrb[0].mxu0
    %891 = vmatprep.mubr.bf16.mxu0 0
    %892 = vmatmul.mubr.bf16.gmra.mrb[0].mxu0 %v176
    %v893 = vpop.f32.mrb[0].mxu0
    %v894 = vadd.f32 0.0, %v893
    %v895 = vpop.f32.mrb[0].mxu0
    %v896 = vpop.f32.mrb[0].mxu0
    %v897 = vadd.f32 0.0, %v896
    %v898 = vpop.f32.mrb[0].mxu0
    %899 = vdwg.mxu0
    %v900 = vmul.f32 %v838, %v333
    %v901 = vmul.f32 %v841, %v338
    %v902 = vmul.f32 %v846, %v343
    %v903 = vmul.f32 %v849, %v348
    %v904 = vmul.f32 %v854, %v353
    %v905 = vmul.f32 %v857, %v358
    %v906 = vmul.f32 %v862, %v363
    %v907 = vmul.f32 %v865, %v368
    %v908 = vmul.f32 %v870, %v373
    %v909 = vmul.f32 %v873, %v378
    %v910 = vmul.f32 %v878, %v383
    %v911 = vmul.f32 %v881, %v388
    %v912 = vmul.f32 %v886, %v393
    %v913 = vmul.f32 %v889, %v398
    %v914 = vmul.f32 %v894, %v403
    %v915 = vmul.f32 %v897, %v408
    %v916 = vpack.c.bf16 %v901, %v900
    %v917 = vpack.c.bf16 %v903, %v902
    %v918 = vpack.c.bf16 %v905, %v904
    %v919 = vpack.c.bf16 %v907, %v906
    %v920 = vpack.c.bf16 %v909, %v908
    %v921 = vpack.c.bf16 %v911, %v910
    %v922 = vpack.c.bf16 %v913, %v912
    %v923 = vpack.c.bf16 %v915, %v914
    %v924 = vld [vmem:[#allocation7] sm:$0xf]
    %v925 = vld [vmem:[#allocation7 + $0x4] sm:$0xf]
    %v926 = vld [vmem:[#allocation7 + $0x8] sm:$0xf]
    %v927 = vld [vmem:[#allocation7 + $0xc] sm:$0xf]
    %v928 = vld [vmem:[#allocation7 + $0x10] sm:$0xf]
    %v929 = vld [vmem:[#allocation7 + $0x14] sm:$0xf]
    %v930 = vld [vmem:[#allocation7 + $0x18] sm:$0xf]
    %v931 = vld [vmem:[#allocation7 + $0x1c] sm:$0xf]
    %v932 = vld [vmem:[#allocation7 + $0x20] sm:$0xf]
    %v933 = vld [vmem:[#allocation7 + $0x24] sm:$0xf]
    %v934 = vld [vmem:[#allocation7 + $0x28] sm:$0xf]
    %v935 = vld [vmem:[#allocation7 + $0x2c] sm:$0xf]
    %v936 = vld [vmem:[#allocation7 + $0x30] sm:$0xf]
    %v937 = vld [vmem:[#allocation7 + $0x34] sm:$0xf]
    %v938 = vld [vmem:[#allocation7 + $0x38] sm:$0xf]
    %v939 = vld [vmem:[#allocation7 + $0x3c] sm:$0xf]
    %v940 = vld [vmem:[%s7] sm:$0x1]
    %v942 = vlaneseq
    %v943 = vshrl.u32 %v942, 7
    %v944 = vsub.s32 0, %v943
    %v945 = vrot.slane %v940, %v944
    %v963 = vunpack.c.l.b16 %v924
    %v964 = vunpack.c.l.b16 %v925
    %v965 = vunpack.c.l.b16 %v926
    %v966 = vunpack.c.l.b16 %v927
    %v967 = vunpack.c.l.b16 %v928
    %v968 = vunpack.c.l.b16 %v929
    %v969 = vunpack.c.l.b16 %v930
    %v970 = vunpack.c.l.b16 %v931
    %v971 = vunpack.c.l.b16 %v932
    %v972 = vunpack.c.l.b16 %v933
    %v973 = vunpack.c.l.b16 %v934
    %v974 = vunpack.c.l.b16 %v935
    %v975 = vunpack.c.l.b16 %v936
    %v976 = vunpack.c.l.b16 %v937
    %v977 = vunpack.c.l.b16 %v938
    %v978 = vunpack.c.l.b16 %v939
    %v979 = vpack.c.b16 %v964, %v963
    %v980 = vpack.c.b16 %v966, %v965
    %v981 = vpack.c.b16 %v968, %v967
    %v982 = vpack.c.b16 %v970, %v969
    %v983 = vpack.c.b16 %v972, %v971
    %v984 = vpack.c.b16 %v974, %v973
    %v985 = vpack.c.b16 %v976, %v975
    %v986 = vpack.c.b16 %v978, %v977
    %995 = vmatprep.subr.bf16.mxu0 0
    %996 = vmatpush1.bf16.msra.mxu0 %v979
    %997 = vmatprep.subr.bf16.mxu0 0
    %998 = vmatpush1.bf16.msra.mxu0 %v980
    %999 = vmatprep.subr.bf16.mxu0 0
    %1000 = vmatpush1.bf16.msra.mxu0 %v981
    %1001 = vmatprep.subr.bf16.mxu0 0
    %1002 = vmatpush1.bf16.msra.mxu0 %v982
    %1003 = vmatprep.subr.bf16.mxu0 0
    %1004 = vmatpush1.bf16.msra.mxu0 %v983
    %1005 = vmatprep.subr.bf16.mxu0 0
    %1006 = vmatpush1.bf16.msra.mxu0 %v984
    %1007 = vmatprep.subr.bf16.mxu0 0
    %1008 = vmatpush1.bf16.msra.mxu0 %v985
    %1009 = vmatprep.subr.bf16.mxu0 0
    %1010 = vmatpush1.bf16.msra.mxu0 %v986
    %1011 = vmatprep.subr.bf16.mxu0 0
    %1012 = vmatpush1.bf16.msra.mxu0 0
    %1013 = vmatprep.subr.bf16.mxu0 0
    %1014 = vmatpush1.bf16.msra.mxu0 0
    %1015 = vmatprep.subr.bf16.mxu0 0
    %1016 = vmatpush1.bf16.msra.mxu0 0
    %1017 = vmatprep.subr.bf16.mxu0 0
    %1018 = vmatpush1.bf16.msra.mxu0 0
    %1019 = vmatprep.subr.bf16.mxu0 0
    %1020 = vmatpush1.bf16.msra.mxu0 0
    %1021 = vmatprep.subr.bf16.mxu0 0
    %1022 = vmatpush1.bf16.msra.mxu0 0
    %1023 = vmatprep.subr.bf16.mxu0 0
    %1024 = vmatpush1.bf16.msra.mxu0 0
    %1025 = vmatprep.subr.bf16.mxu0 0
    %1026 = vmatpush1.bf16.msra.mxu0 0
    %1027 = vmatprep.mubr.bf16.mxu0 0
    %1028 = vmatmul.mubr.bf16.gmra.mrb[0].mxu0 %v916
    %v1029 = vpop.f32.mrb[0].mxu0
    %v1030 = vadd.f32 %v945, %v1029
    %v1031 = vpop.f32.mrb[0].mxu0
    %v1032 = vpop.f32.mrb[0].mxu0
    %v1033 = vadd.f32 %v945, %v1032
    %v1034 = vpop.f32.mrb[0].mxu0
    %1035 = vmatprep.mubr.bf16.mxu0 0
    %1036 = vmatmul.mubr.bf16.gmra.mrb[0].mxu0 %v917
    %v1037 = vpop.f32.mrb[0].mxu0
    %v1038 = vadd.f32 %v945, %v1037
    %v1039 = vpop.f32.mrb[0].mxu0
    %v1040 = vpop.f32.mrb[0].mxu0
    %v1041 = vadd.f32 %v945, %v1040
    %v1042 = vpop.f32.mrb[0].mxu0
    %1043 = vmatprep.mubr.bf16.mxu0 0
    %1044 = vmatmul.mubr.bf16.gmra.mrb[0].mxu0 %v918
    %v1045 = vpop.f32.mrb[0].mxu0
    %v1046 = vadd.f32 %v945, %v1045
    %v1047 = vpop.f32.mrb[0].mxu0
    %v1048 = vpop.f32.mrb[0].mxu0
    %v1049 = vadd.f32 %v945, %v1048
    %v1050 = vpop.f32.mrb[0].mxu0
    %1051 = vmatprep.mubr.bf16.mxu0 0
    %1052 = vmatmul.mubr.bf16.gmra.mrb[0].mxu0 %v919
    %v1053 = vpop.f32.mrb[0].mxu0
    %v1054 = vadd.f32 %v945, %v1053
    %v1055 = vpop.f32.mrb[0].mxu0
    %v1056 = vpop.f32.mrb[0].mxu0
    %v1057 = vadd.f32 %v945, %v1056
    %v1058 = vpop.f32.mrb[0].mxu0
    %1059 = vmatprep.mubr.bf16.mxu0 0
    %1060 = vmatmul.mubr.bf16.gmra.mrb[0].mxu0 %v920
    %v1061 = vpop.f32.mrb[0].mxu0
    %v1062 = vadd.f32 %v945, %v1061
    %v1063 = vpop.f32.mrb[0].mxu0
    %v1064 = vpop.f32.mrb[0].mxu0
    %v1065 = vadd.f32 %v945, %v1064
    %v1066 = vpop.f32.mrb[0].mxu0
    %1067 = vmatprep.mubr.bf16.mxu0 0
    %1068 = vmatmul.mubr.bf16.gmra.mrb[0].mxu0 %v921
    %v1069 = vpop.f32.mrb[0].mxu0
    %v1070 = vadd.f32 %v945, %v1069
    %v1071 = vpop.f32.mrb[0].mxu0
    %v1072 = vpop.f32.mrb[0].mxu0
    %v1073 = vadd.f32 %v945, %v1072
    %v1074 = vpop.f32.mrb[0].mxu0
    %1075 = vmatprep.mubr.bf16.mxu0 0
    %1076 = vmatmul.mubr.bf16.gmra.mrb[0].mxu0 %v922
    %v1077 = vpop.f32.mrb[0].mxu0
    %v1078 = vadd.f32 %v945, %v1077
    %v1079 = vpop.f32.mrb[0].mxu0
    %v1080 = vpop.f32.mrb[0].mxu0
    %v1081 = vadd.f32 %v945, %v1080
    %v1082 = vpop.f32.mrb[0].mxu0
    %1083 = vmatprep.mubr.bf16.mxu0 0
    %1084 = vmatmul.mubr.bf16.gmra.mrb[0].mxu0 %v923
    %v1085 = vpop.f32.mrb[0].mxu0
    %v1086 = vadd.f32 %v945, %v1085
    %v1087 = vpop.f32.mrb[0].mxu0
    %v1088 = vpop.f32.mrb[0].mxu0
    %v1089 = vadd.f32 %v945, %v1088
    %v1090 = vpop.f32.mrb[0].mxu0
    %1091 = vdwg.mxu0
    %v1092 = vld [vmem:[#allocation8] sm:$0xf]
    %v1093 = vld [vmem:[#allocation8 + $0x4] sm:$0xf]
    %v1094 = vld [vmem:[#allocation8 + $0x8] sm:$0xf]
    %v1095 = vld [vmem:[#allocation8 + $0xc] sm:$0xf]
    %v1096 = vld [vmem:[#allocation8 + $0x10] sm:$0xf]
    %v1097 = vld [vmem:[#allocation8 + $0x14] sm:$0xf]
    %v1098 = vld [vmem:[#allocation8 + $0x18] sm:$0xf]
    %v1099 = vld [vmem:[#allocation8 + $0x1c] sm:$0xf]
    %v1100 = vld [vmem:[#allocation8 + $0x20] sm:$0xf]
    %v1101 = vld [vmem:[#allocation8 + $0x24] sm:$0xf]
    %v1102 = vld [vmem:[#allocation8 + $0x28] sm:$0xf]
    %v1103 = vld [vmem:[#allocation8 + $0x2c] sm:$0xf]
    %v1104 = vld [vmem:[#allocation8 + $0x30] sm:$0xf]
    %v1105 = vld [vmem:[#allocation8 + $0x34] sm:$0xf]
    %v1106 = vld [vmem:[#allocation8 + $0x38] sm:$0xf]
    %v1107 = vld [vmem:[#allocation8 + $0x3c] sm:$0xf]
    %v1124 = vunpack.c.l.b16 %v1092
    %v1125 = vunpack.c.l.b16 %v1093
    %v1126 = vunpack.c.l.b16 %v1094
    %v1127 = vunpack.c.l.b16 %v1095
    %v1128 = vunpack.c.l.b16 %v1096
    %v1129 = vunpack.c.l.b16 %v1097
    %v1130 = vunpack.c.l.b16 %v1098
    %v1131 = vunpack.c.l.b16 %v1099
    %v1132 = vunpack.c.l.b16 %v1100
    %v1133 = vunpack.c.l.b16 %v1101
    %v1134 = vunpack.c.l.b16 %v1102
    %v1135 = vunpack.c.l.b16 %v1103
    %v1136 = vunpack.c.l.b16 %v1104
    %v1137 = vunpack.c.l.b16 %v1105
    %v1138 = vunpack.c.l.b16 %v1106
    %v1139 = vunpack.c.l.b16 %v1107
    %v1140 = vpack.c.b16 %v1125, %v1124
    %v1141 = vpack.c.b16 %v1127, %v1126
    %v1142 = vpack.c.b16 %v1129, %v1128
    %v1143 = vpack.c.b16 %v1131, %v1130
    %v1144 = vpack.c.b16 %v1133, %v1132
    %v1145 = vpack.c.b16 %v1135, %v1134
    %v1146 = vpack.c.b16 %v1137, %v1136
    %v1147 = vpack.c.b16 %v1139, %v1138
    %1156 = vmatprep.subr.bf16.mxu0 0
    %1157 = vmatpush1.bf16.msra.mxu0 %v1140
    %1158 = vmatprep.subr.bf16.mxu0 0
    %1159 = vmatpush1.bf16.msra.mxu0 %v1141
    %1160 = vmatprep.subr.bf16.mxu0 0
    %1161 = vmatpush1.bf16.msra.mxu0 %v1142
    %1162 = vmatprep.subr.bf16.mxu0 0
    %1163 = vmatpush1.bf16.msra.mxu0 %v1143
    %1164 = vmatprep.subr.bf16.mxu0 0
    %1165 = vmatpush1.bf16.msra.mxu0 %v1144
    %1166 = vmatprep.subr.bf16.mxu0 0
    %1167 = vmatpush1.bf16.msra.mxu0 %v1145
    %1168 = vmatprep.subr.bf16.mxu0 0
    %1169 = vmatpush1.bf16.msra.mxu0 %v1146
    %1170 = vmatprep.subr.bf16.mxu0 0
    %1171 = vmatpush1.bf16.msra.mxu0 %v1147
    %1172 = vmatprep.subr.bf16.mxu0 0
    %1173 = vmatpush1.bf16.msra.mxu0 0
    %1174 = vmatprep.subr.bf16.mxu0 0
    %1175 = vmatpush1.bf16.msra.mxu0 0
    %1176 = vmatprep.subr.bf16.mxu0 0
    %1177 = vmatpush1.bf16.msra.mxu0 0
    %1178 = vmatprep.subr.bf16.mxu0 0
    %1179 = vmatpush1.bf16.msra.mxu0 0
    %1180 = vmatprep.subr.bf16.mxu0 0
    %1181 = vmatpush1.bf16.msra.mxu0 0
    %1182 = vmatprep.subr.bf16.mxu0 0
    %1183 = vmatpush1.bf16.msra.mxu0 0
    %1184 = vmatprep.subr.bf16.mxu0 0
    %1185 = vmatpush1.bf16.msra.mxu0 0
    %1186 = vmatprep.subr.bf16.mxu0 0
    %1187 = vmatpush1.bf16.msra.mxu0 0
    %1188 = vmatprep.mubr.bf16.mxu0 0
    %1189 = vmatmul.mubr.bf16.gmra.mrb[0].mxu0 %v795
    %v1190 = vpop.f32.mrb[0].mxu0
    %v1191 = vadd.f32 0.0, %v1190
    %v1192 = vpop.f32.mrb[0].mxu0
    %v1193 = vpop.f32.mrb[0].mxu0
    %v1194 = vadd.f32 0.0, %v1193
    %v1195 = vpop.f32.mrb[0].mxu0
    %1196 = vmatprep.mubr.bf16.mxu0 0
    %1197 = vmatmul.mubr.bf16.gmra.mrb[0].mxu0 %v796
    %v1198 = vpop.f32.mrb[0].mxu0
    %v1199 = vadd.f32 0.0, %v1198
    %v1200 = vpop.f32.mrb[0].mxu0
    %v1201 = vpop.f32.mrb[0].mxu0
    %v1202 = vadd.f32 0.0, %v1201
    %v1203 = vpop.f32.mrb[0].mxu0
    %1204 = vmatprep.mubr.bf16.mxu0 0
    %1205 = vmatmul.mubr.bf16.gmra.mrb[0].mxu0 %v797
    %v1206 = vpop.f32.mrb[0].mxu0
    %v1207 = vadd.f32 0.0, %v1206
    %v1208 = vpop.f32.mrb[0].mxu0
    %v1209 = vpop.f32.mrb[0].mxu0
    %v1210 = vadd.f32 0.0, %v1209
    %v1211 = vpop.f32.mrb[0].mxu0
    %1212 = vmatprep.mubr.bf16.mxu0 0
    %1213 = vmatmul.mubr.bf16.gmra.mrb[0].mxu0 %v798
    %v1214 = vpop.f32.mrb[0].mxu0
    %v1215 = vadd.f32 0.0, %v1214
    %v1216 = vpop.f32.mrb[0].mxu0
    %v1217 = vpop.f32.mrb[0].mxu0
    %v1218 = vadd.f32 0.0, %v1217
    %v1219 = vpop.f32.mrb[0].mxu0
    %1220 = vmatprep.mubr.bf16.mxu0 0
    %1221 = vmatmul.mubr.bf16.gmra.mrb[0].mxu0 %v799
    %v1222 = vpop.f32.mrb[0].mxu0
    %v1223 = vadd.f32 0.0, %v1222
    %v1224 = vpop.f32.mrb[0].mxu0
    %v1225 = vpop.f32.mrb[0].mxu0
    %v1226 = vadd.f32 0.0, %v1225
    %v1227 = vpop.f32.mrb[0].mxu0
    %1228 = vmatprep.mubr.bf16.mxu0 0
    %1229 = vmatmul.mubr.bf16.gmra.mrb[0].mxu0 %v800
    %v1230 = vpop.f32.mrb[0].mxu0
    %v1231 = vadd.f32 0.0, %v1230
    %v1232 = vpop.f32.mrb[0].mxu0
    %v1233 = vpop.f32.mrb[0].mxu0
    %v1234 = vadd.f32 0.0, %v1233
    %v1235 = vpop.f32.mrb[0].mxu0
    %1236 = vmatprep.mubr.bf16.mxu0 0
    %1237 = vmatmul.mubr.bf16.gmra.mrb[0].mxu0 %v801
    %v1238 = vpop.f32.mrb[0].mxu0
    %v1239 = vadd.f32 0.0, %v1238
    %v1240 = vpop.f32.mrb[0].mxu0
    %v1241 = vpop.f32.mrb[0].mxu0
    %v1242 = vadd.f32 0.0, %v1241
    %v1243 = vpop.f32.mrb[0].mxu0
    %1244 = vmatprep.mubr.bf16.mxu0 0
    %1245 = vmatmul.mubr.bf16.gmra.mrb[0].mxu0 %v802
    %v1246 = vpop.f32.mrb[0].mxu0
    %v1247 = vadd.f32 0.0, %v1246
    %v1248 = vpop.f32.mrb[0].mxu0
    %v1249 = vpop.f32.mrb[0].mxu0
    %v1250 = vadd.f32 0.0, %v1249
    %v1251 = vpop.f32.mrb[0].mxu0
    %1252 = vdwg.mxu0
    %v1253 = vadd.f32 %v1030, %v1191
    %v1254 = vadd.f32 %v1033, %v1194
    %v1255 = vadd.f32 %v1038, %v1199
    %v1256 = vadd.f32 %v1041, %v1202
    %v1257 = vadd.f32 %v1046, %v1207
    %v1258 = vadd.f32 %v1049, %v1210
    %v1259 = vadd.f32 %v1054, %v1215
    %v1260 = vadd.f32 %v1057, %v1218
    %v1261 = vadd.f32 %v1062, %v1223
    %v1262 = vadd.f32 %v1065, %v1226
    %v1263 = vadd.f32 %v1070, %v1231
    %v1264 = vadd.f32 %v1073, %v1234
    %v1265 = vadd.f32 %v1078, %v1239
    %v1266 = vadd.f32 %v1081, %v1242
    %v1267 = vadd.f32 %v1086, %v1247
    %v1268 = vadd.f32 %v1089, %v1250
    %v1269 = vmax.f32 %v1253, 0.0
    %v1270 = vmax.f32 %v1254, 0.0
    %v1271 = vmax.f32 %v1255, 0.0
    %v1272 = vmax.f32 %v1256, 0.0
    %v1273 = vmax.f32 %v1257, 0.0
    %v1274 = vmax.f32 %v1258, 0.0
    %v1275 = vmax.f32 %v1259, 0.0
    %v1276 = vmax.f32 %v1260, 0.0
    %v1277 = vmax.f32 %v1261, 0.0
    %v1278 = vmax.f32 %v1262, 0.0
    %v1279 = vmax.f32 %v1263, 0.0
    %v1280 = vmax.f32 %v1264, 0.0
    %v1281 = vmax.f32 %v1265, 0.0
    %v1282 = vmax.f32 %v1266, 0.0
    %v1283 = vmax.f32 %v1267, 0.0
    %v1284 = vmax.f32 %v1268, 0.0
    %v1285 = vpack.c.bf16 %v1270, %v1269
    %v1286 = vpack.c.bf16 %v1272, %v1271
    %v1287 = vpack.c.bf16 %v1274, %v1273
    %v1288 = vpack.c.bf16 %v1276, %v1275
    %v1289 = vpack.c.bf16 %v1278, %v1277
    %v1290 = vpack.c.bf16 %v1280, %v1279
    %v1291 = vpack.c.bf16 %v1282, %v1281
    %v1292 = vpack.c.bf16 %v1284, %v1283
    %v1301 = vunpack.c.l.b16 %v1285
    %v1302 = vunpack.c.h.b16 %v1285
    %v1303 = vunpack.c.l.b16 %v1286
    %v1304 = vunpack.c.h.b16 %v1286
    %v1305 = vunpack.c.l.b16 %v1287
    %v1306 = vunpack.c.h.b16 %v1287
    %v1307 = vunpack.c.l.b16 %v1288
    %v1308 = vunpack.c.h.b16 %v1288
    %v1309 = vunpack.c.l.b16 %v1289
    %v1310 = vunpack.c.h.b16 %v1289
    %v1311 = vunpack.c.l.b16 %v1290
    %v1312 = vunpack.c.h.b16 %v1290
    %v1313 = vunpack.c.l.b16 %v1291
    %v1314 = vunpack.c.h.b16 %v1291
    %v1315 = vunpack.c.l.b16 %v1292
    %v1316 = vunpack.c.h.b16 %v1292
    %v1317 = vpack.c.b16 %v1301, %v1301
    %v1318 = vpack.c.b16 %v1302, %v1302
    %v1319 = vpack.c.b16 %v1303, %v1303
    %v1320 = vpack.c.b16 %v1304, %v1304
    %v1321 = vpack.c.b16 %v1305, %v1305
    %v1322 = vpack.c.b16 %v1306, %v1306
    %v1323 = vpack.c.b16 %v1307, %v1307
    %v1324 = vpack.c.b16 %v1308, %v1308
    %v1325 = vpack.c.b16 %v1309, %v1309
    %v1326 = vpack.c.b16 %v1310, %v1310
    %v1327 = vpack.c.b16 %v1311, %v1311
    %v1328 = vpack.c.b16 %v1312, %v1312
    %v1329 = vpack.c.b16 %v1313, %v1313
    %v1330 = vpack.c.b16 %v1314, %v1314
    %v1331 = vpack.c.b16 %v1315, %v1315
    %v1332 = vpack.c.b16 %v1316, %v1316
    %1349 = vst [vmem:[#allocation10] sm:$0xf] %v1317
    %1350 = vst [vmem:[#allocation10 + $0x4] sm:$0xf] %v1318
    %1351 = vst [vmem:[#allocation10 + $0x8] sm:$0xf] %v1319
    %1352 = vst [vmem:[#allocation10 + $0xc] sm:$0xf] %v1320
    %1353 = vst [vmem:[#allocation10 + $0x10] sm:$0xf] %v1321
    %1354 = vst [vmem:[#allocation10 + $0x14] sm:$0xf] %v1322
    %1355 = vst [vmem:[#allocation10 + $0x18] sm:$0xf] %v1323
    %1356 = vst [vmem:[#allocation10 + $0x1c] sm:$0xf] %v1324
    %1357 = vst [vmem:[#allocation10 + $0x20] sm:$0xf] %v1325
    %1358 = vst [vmem:[#allocation10 + $0x24] sm:$0xf] %v1326
    %1359 = vst [vmem:[#allocation10 + $0x28] sm:$0xf] %v1327
    %1360 = vst [vmem:[#allocation10 + $0x2c] sm:$0xf] %v1328
    %1361 = vst [vmem:[#allocation10 + $0x30] sm:$0xf] %v1329
    %1362 = vst [vmem:[#allocation10 + $0x34] sm:$0xf] %v1330
    %1363 = vst [vmem:[#allocation10 + $0x38] sm:$0xf] %v1331
    %1364 = vst [vmem:[#allocation10 + $0x3c] sm:$0xf] %v1332
    // Predicated region
    $region54: #{tpu_custom_call.1} parent=1 // pred_check
      _
    $region55: #{tpu_custom_call.1} parent=1 // pred_check_branch
      %1366 = sbr.rel (0) target = $region57
    $region56: #{tpu_custom_call.1} parent=1 // pred_region
      %s1368 = ssub.s32 1024, 1024
      %1369 = vsyncadd [#allocation4], %s1368
      %s1370 = sshll.u32 [#allocation10], 4
      %s1371 = int_to_ptr.vmem [resolvable:$true] %s1370
      %1376 = dma.vmem_to_hbm [thread:$0]  %s1371, 1024, %s9, [#allocation4], 64, 64, 4
    $region57: #{tpu_custom_call.1} parent=1 // pred_fallthru
      _
    // Predicated region
    $region58: #{tpu_custom_call.1} parent=1 // pred_check
      _
    $region59: #{tpu_custom_call.1} parent=1 // pred_check_branch
      %1378 = sbr.rel (0) target = $region61
    $region60: #{tpu_custom_call.1} parent=1 // pred_region
      %1379 = dma.done [#allocation4], 1024
    $region61: #{tpu_custom_call.1} parent=1 // pred_fallthru
      _
    %1380 = vsyncpa [#allocation3], 1
    %1381 = vsyncpa [#allocation6], 1
    %1382 = vsyncpa [#allocation9], 1
    %1383 = vsyncpa [#allocation4], 1

</llo_original>
